<compile_context>
chip_gen: v7x
topology: tpu7x:2x2x1
jax: 0.10.0
libtpu: 0.0.40
codegen_flags: <defaults>
</compile_context>

<pallas_src>
import jax
import jax.numpy as jnp
import numpy as np
from jax.experimental import pallas as pl
from jax.experimental.pallas import tpu as pltpu  # noqa: F401 (TPU backend)

_EPS = 1e-5  # PyTorch BatchNorm2d default


def _block25_kernel(x_ref, p_ref, o_ref):
    """Fused TestBlock25 forward over the whole (folded) tensor.

    x_ref : (R, HW) f32 activations, R = N*C rows, HW lane-dense (multiple of 128)
    p_ref : (R, 6)  f32 packed per-row params: [s1, b1, s2, b2, A, B]
    o_ref : (R, HW) f32 output
    Pure VPU element-wise work; all intermediates stay in vregs.
    """
    x = x_ref[...]                         # (R, HW)
    p = p_ref[...]                         # (R, 6)
    s1, b1 = p[:, 0:1], p[:, 1:2]
    s2, b2 = p[:, 2:3], p[:, 3:4]
    a,  b  = p[:, 4:5], p[:, 5:6]          # A = 2 + s2 + s3, B = b2 + b3

    x1 = jnp.maximum(x * s1 + b1, 0.0)     # x1 = relu1(bn1(x))
    y = x1 * s2 + b2                       # y  = bn2(x1)
    # out = x1 + y + z + u + v  with z == x1, u = x1*s3 + b3, v = relu(y)
    o_ref[...] = x1 * a + b + jnp.maximum(y, 0.0)


def pack_block25_params(raw_params, n, eps=_EPS):
    """Fold the three eval-mode BatchNorms and pack per-row params.

    raw_params: [(gamma, beta, running_mean, running_var)] * 3, each (C,)
    Returns a (N*C, 6) f32 array with columns [s1, b1, s2, b2, A, B]; row r of the
    reshaped (N*C, H*W) activation corresponds to channel r % C.
    Done ONCE outside the jitted forward.
    """
    scales, shifts = [], []
    for gamma, beta, mean, var in raw_params:
        s = gamma / jnp.sqrt(var + eps)
        scales.append(s)
        shifts.append(beta - mean * s)
    s1, s2, s3 = scales
    b1, b2, b3 = shifts
    a = 2.0 + s2 + s3
    b = b2 + b3
    cols = jnp.stack([s1, b1, s2, b2, a, b], axis=-1).astype(jnp.float32)  # (C, 6)
    return jnp.tile(cols, (n, 1))                                          # (N*C, 6)


@jax.jit
def testblock25_pallas(x_nchw, packed_params):
    """x_nchw: (N, C, H, W) f32; packed_params: (N*C, 6) f32 from pack_block25_params."""
    N, C, H, W = x_nchw.shape
    R, HW = N * C, H * W
    x2 = x_nchw.reshape(R, HW).astype(jnp.float32)   # lane dim HW = 256 (multiple of 128)

    out = pl.pallas_call(
        _block25_kernel,
        out_shape=jax.ShapeDtypeStruct((R, HW), jnp.float32),
        grid=(1,),                                    # single step: no per-step overhead
        in_specs=[
            pl.BlockSpec((R, HW), lambda i: (0, 0)),  # full-tensor block
            pl.BlockSpec((R, 6), lambda i: (0, 0)),   # single packed param tile
        ],
        out_specs=pl.BlockSpec((R, HW), lambda i: (0, 0)),
    )(x2, packed_params)

    return out.reshape(N, C, H, W)


def make_bn_params(key, num_features=3):
    """Deterministic synthetic BatchNorm2d parameters (gamma, beta, mean, var) x3."""
    ks = jax.random.split(key, 12)
    layers = []
    for i in range(3):
        gamma = 1.0 + 0.1 * jax.random.normal(ks[4 * i + 0], (num_features,), jnp.float32)
        beta = 0.1 * jax.random.normal(ks[4 * i + 1], (num_features,), jnp.float32)
        mean = 0.1 * jax.random.normal(ks[4 * i + 2], (num_features,), jnp.float32)
        var = jax.random.uniform(ks[4 * i + 3], (num_features,), jnp.float32, 0.5, 1.5)
        layers.append((gamma, beta, mean, var))
    return layers


def testblock25_ref(x_nchw, raw_params):
    """Pure-JAX reference (eval-mode BN), mirroring the PyTorch graph op-by-op."""
    def bn(x, p):
        gamma, beta, mean, var = p
        inv = 1.0 / jnp.sqrt(var + _EPS)
        return (x - mean[None, :, None, None]) * (gamma * inv)[None, :, None, None] \
            + beta[None, :, None, None]

    x = x_nchw.astype(jnp.float32)
    x = jax.nn.relu(bn(x, raw_params[0]))   # x = relu1(bn1(x))
    y = bn(x, raw_params[1])                # y = bn2(x)
    z = jax.nn.relu(x)                      # z = relu2(x)
    u = bn(z, raw_params[2])                # u = bn3(z)
    v = jax.nn.relu(y)                      # v = relu3(y)
    return x + y + z + u + v


if __name__ == "__main__":
    key = jax.random.PRNGKey(0)
    k_x, k_p = jax.random.split(key)

    # Input consistent with BatchNorm2d(num_features=3): NCHW (2, 3, 16, 16)
    N, C, H, W = 2, 3, 16, 16
    x = jax.random.normal(k_x, (N, C, H, W), jnp.float32)
    raw_params = make_bn_params(k_p, num_features=C)

    # Fold + pack BN parameters once, outside the jitted forward.
    packed = pack_block25_params(raw_params, n=N)

    out = jax.block_until_ready(testblock25_pallas(x, packed))
    ref = jax.block_until_ready(testblock25_ref(x, raw_params))

    assert out.shape == ref.shape, (out.shape, ref.shape)
    np.testing.assert_allclose(np.asarray(out), np.asarray(ref), rtol=1e-5, atol=1e-5)

    print("KERNEL_OK")
</pallas_src>

<mosaic_0001>
module attributes {stable_mosaic.version = 11 : i64} {
  func.func @_block25_kernel(%arg0: i32, %arg1: memref<6x256xf32, #tpu.memory_space<vmem>>, %arg2: memref<6x6xf32, #tpu.memory_space<vmem>>, %arg3: memref<6x256xf32, #tpu.memory_space<vmem>>) attributes {dimension_semantics = [#tpu.dimension_semantics<arbitrary>], iteration_bounds = array<i64: 1>, scalar_prefetch = 0 : i64, scratch_operands = 0 : i64, tpu.core_type = #tpu.core_type<tc>, window_params = [{pipeline_mode = #tpu.pipeline_mode<synchronous>, transform_indices = @transform_0, window_bounds = array<i64: 6, 256>}, {pipeline_mode = #tpu.pipeline_mode<synchronous>, transform_indices = @transform_1, window_bounds = array<i64: 6, 6>}, {pipeline_mode = #tpu.pipeline_mode<synchronous>, transform_indices = @transform_2, window_bounds = array<i64: 6, 256>}]} {
    %c0 = arith.constant 0 : index
    %c0_0 = arith.constant 0 : index
    %0 = vector.load %arg1[%c0, %c0_0] : memref<6x256xf32, #tpu.memory_space<vmem>>, vector<6x256xf32>
    %c0_1 = arith.constant 0 : index
    %c0_2 = arith.constant 0 : index
    %1 = vector.load %arg2[%c0_1, %c0_2] : memref<6x6xf32, #tpu.memory_space<vmem>>, vector<6x6xf32>
    %2 = vector.extract_strided_slice %1 {offsets = [0, 0], sizes = [6, 1], strides = [1, 1]} : vector<6x6xf32> to vector<6x1xf32>
    %3 = vector.extract_strided_slice %1 {offsets = [0, 1], sizes = [6, 1], strides = [1, 1]} : vector<6x6xf32> to vector<6x1xf32>
    %4 = vector.extract_strided_slice %1 {offsets = [0, 2], sizes = [6, 1], strides = [1, 1]} : vector<6x6xf32> to vector<6x1xf32>
    %5 = vector.extract_strided_slice %1 {offsets = [0, 3], sizes = [6, 1], strides = [1, 1]} : vector<6x6xf32> to vector<6x1xf32>
    %6 = vector.extract_strided_slice %1 {offsets = [0, 4], sizes = [6, 1], strides = [1, 1]} : vector<6x6xf32> to vector<6x1xf32>
    %7 = vector.extract_strided_slice %1 {offsets = [0, 5], sizes = [6, 1], strides = [1, 1]} : vector<6x6xf32> to vector<6x1xf32>
    %8 = vector.broadcast %2 : vector<6x1xf32> to vector<6x256xf32>
    %9 = arith.mulf %0, %8 : vector<6x256xf32>
    %10 = vector.broadcast %3 : vector<6x1xf32> to vector<6x256xf32>
    %11 = arith.addf %9, %10 : vector<6x256xf32>
    %cst = arith.constant 0.000000e+00 : f32
    %12 = vector.broadcast %cst : f32 to vector<6x256xf32>
    %13 = arith.maximumf %11, %12 : vector<6x256xf32>
    %14 = vector.broadcast %4 : vector<6x1xf32> to vector<6x256xf32>
    %15 = arith.mulf %13, %14 : vector<6x256xf32>
    %16 = vector.broadcast %5 : vector<6x1xf32> to vector<6x256xf32>
    %17 = arith.addf %15, %16 : vector<6x256xf32>
    %18 = vector.broadcast %6 : vector<6x1xf32> to vector<6x256xf32>
    %19 = arith.mulf %13, %18 : vector<6x256xf32>
    %20 = vector.broadcast %7 : vector<6x1xf32> to vector<6x256xf32>
    %21 = arith.addf %19, %20 : vector<6x256xf32>
    %cst_3 = arith.constant 0.000000e+00 : f32
    %22 = vector.broadcast %cst_3 : f32 to vector<6x256xf32>
    %23 = arith.maximumf %17, %22 : vector<6x256xf32>
    %24 = arith.addf %21, %23 : vector<6x256xf32>
    %c0_4 = arith.constant 0 : index
    %c0_5 = arith.constant 0 : index
    %25 = vector.load %arg3[%c0_4, %c0_5] : memref<6x256xf32, #tpu.memory_space<vmem>>, vector<6x256xf32>
    tpu.vector_store %arg3[%c0_4, %c0_5], %24 {strides = array<i32>} : memref<6x256xf32, #tpu.memory_space<vmem>>, vector<6x256xf32>,
    return
  }
  func.func @transform_0(%arg0: i32) -> (i32, i32) {
    %c0_i32 = arith.constant 0 : i32
    %c0_i32_0 = arith.constant 0 : i32
    %c0_i32_1 = arith.constant 0 : i32
    return %c0_i32, %c0_i32_0 : i32, i32
  }
  func.func @transform_1(%arg0: i32) -> (i32, i32) {
    %c0_i32 = arith.constant 0 : i32
    %c0_i32_0 = arith.constant 0 : i32
    %c0_i32_1 = arith.constant 0 : i32
    return %c0_i32, %c0_i32_0 : i32, i32
  }
  func.func @transform_2(%arg0: i32) -> (i32, i32) {
    %c0_i32 = arith.constant 0 : i32
    %c0_i32_0 = arith.constant 0 : i32
    %c0_i32_1 = arith.constant 0 : i32
    return %c0_i32, %c0_i32_0 : i32, i32
  }
}

</mosaic_0001>

<llo_original>
// kernel: testblock25_pallas.1
$region0: #{testblock25_pallas.1}
  #allocation0 [shape = 'u32[]', space=smem, size = 0x4, offset = 0x4, fixed_abs, tag = 'smem constant byte address 0x4 - core index']
  #allocation1 [shape = 'u32[144,128]{1,0:T(1,128)}', space=vmem, size = 0x12000, scoped, tag = 'internal scratch']
  %s0 = inlined_call_operand.vmem [shape: f32[6,256], index: 0, kind: input, shape index: {}]
  %s1 = inlined_call_operand.vmem [shape: f32[6,6], index: 1, kind: input, shape index: {}]
  %s2 = inlined_call_operand.vmem [shape: f32[6,256], index: 2, kind: output, shape index: {}]
  %s3 = sld [smem:[#allocation0]]
  $region18: #{testblock25_pallas.1} parent=0
    _
  %s5 = ssub.s32 1, %s3
  %s6 = scalar_select 0, %s5, %s3
  // Predicated region
  $region2: #{testblock25_pallas.1} parent=0 // pred_check
    _
  $region3: #{testblock25_pallas.1} parent=0 // pred_check_branch
    %8 = sbr.rel (0) target = $region5
  $region4: #{testblock25_pallas.1} parent=0 // pred_region
    _
  $region5: #{testblock25_pallas.1} parent=0 // pred_fallthru
    _
  // Predicated region
  $region6: #{testblock25_pallas.1} parent=0 // pred_check
    _
  $region7: #{testblock25_pallas.1} parent=0 // pred_check_branch
    %10 = sbr.rel (0) target = $region9
  $region8: #{testblock25_pallas.1} parent=0 // pred_region
    _
  $region9: #{testblock25_pallas.1} parent=0 // pred_fallthru
    _
  %v11 = vld [vmem:[%s0] sm:$0x3f]
  %v12 = vld [vmem:[%s0 + $0x8] sm:$0x3f]
  %v13 = vld [vmem:[%s1] sm:$0x3f]
  %15 = vset.pattern.permute.xlu0 0
  %16 = vperm.xlu0 %15, %v13
  %v17 = vpop.permute.xlu0 %16
  %v19 = vmul.f32 %v11, %v17
  %v20 = vmul.f32 %v12, %v17
  %21 = vset.pattern.permute.xlu0 1
  %22 = vperm.xlu0 %21, %v13
  %v23 = vpop.permute.xlu0 %22
  %v25 = vadd.f32 %v19, %v23
  %v26 = vadd.f32 %v20, %v23
  %v27 = vmax.f32 %v25, 0.0
  %v28 = vmax.f32 %v26, 0.0
  %29 = vset.pattern.permute.xlu0 2
  %30 = vperm.xlu0 %29, %v13
  %v31 = vpop.permute.xlu0 %30
  %v33 = vmul.f32 %v27, %v31
  %v34 = vmul.f32 %v28, %v31
  %35 = vset.pattern.permute.xlu0 3
  %36 = vperm.xlu0 %35, %v13
  %v37 = vpop.permute.xlu0 %36
  %v39 = vadd.f32 %v33, %v37
  %v40 = vadd.f32 %v34, %v37
  %41 = vset.pattern.permute.xlu0 4
  %42 = vperm.xlu0 %41, %v13
  %v43 = vpop.permute.xlu0 %42
  %v45 = vmul.f32 %v27, %v43
  %v46 = vmul.f32 %v28, %v43
  %47 = vset.pattern.permute.xlu0 5
  %48 = vperm.xlu0 %47, %v13
  %v49 = vpop.permute.xlu0 %48
  %v51 = vadd.f32 %v45, %v49
  %v52 = vadd.f32 %v46, %v49
  %v53 = vmax.f32 %v39, 0.0
  %v54 = vmax.f32 %v40, 0.0
  %v55 = vadd.f32 %v51, %v53
  %v56 = vadd.f32 %v52, %v54
  %57 = vst [vmem:[%s2] sm:$0x3f] %v55
  %58 = vst [vmem:[%s2 + $0x8] sm:$0x3f] %v56
  // Predicated region
  $region10: #{testblock25_pallas.1} parent=0 // pred_check
    _
  $region11: #{testblock25_pallas.1} parent=0 // pred_check_branch
    %60 = sbr.rel (0) target = $region13
  $region12: #{testblock25_pallas.1} parent=0 // pred_region
    _
  $region13: #{testblock25_pallas.1} parent=0 // pred_fallthru
    _
  // Predicated region
  $region14: #{testblock25_pallas.1} parent=0 // pred_check
    _
  $region15: #{testblock25_pallas.1} parent=0 // pred_check_branch
    %62 = sbr.rel (0) target = $region17
  $region16: #{testblock25_pallas.1} parent=0 // pred_region
    _
  $region17: #{testblock25_pallas.1} parent=0 // pred_fallthru
    _

</llo_original>
